<compile_context>
chip_gen: v7x
topology: tpu7x:2x2x1
jax: 0.10.0
libtpu: 0.0.40
codegen_flags: <defaults>
</compile_context>

<pallas_src>
import functools

import jax
import jax.numpy as jnp
from jax.experimental import pallas as pl
from jax.experimental.pallas import tpu as pltpu

LN_EPS = 1e-5   # torch.nn.LayerNorm default eps
LANE = 128
SUBLANE = 8


def _round_up(n, m):
    return ((n + m - 1) // m) * m


# ----------------------------------------------------------------------------- kernel
def dqn_kernel(x_ref, w1_ref, w2_ref, w3_ref, pbh_ref, b3_ref, o_ref, *, inv_h):
    """One batch tile of the full MLP.

    x_ref  : (TB, K)  bf16  input tile (K = real state_dim, not lane-padded)
    w1_ref : (K, H)   bf16  layer1 weight (in, out), hidden padded to H lanes
    w2_ref : (H, H)   bf16  layer2 weight
    w3_ref : (H, A)   bf16  layer3 weight, actions padded to A lanes
    pbh_ref: (8, H)   f32   packed rows: b1, b2, gamma, beta, 0...
    b3_ref : (1, A)   f32   layer3 bias
    o_ref  : (TB, A)  f32   output tile (real Q-values in first num_actions lanes)
    """
    x = x_ref[...]                     # (TB, K) bf16
    pbh = pbh_ref[...]                 # (8, H) f32
    b1 = pbh[0:1, :]
    b2 = pbh[1:2, :]
    gamma = pbh[2:3, :]                # zero in padded lanes -> re-zeroes padding
    beta = pbh[3:4, :]

    def ln_relu(h):
        # Padded lanes of h are exactly zero (zero weight cols / bias lanes), so
        # full-width sums equal sums over the real H features; divide by the real
        # H (inv_h), not the padded lane width.
        mu = jnp.sum(h, axis=-1, keepdims=True) * inv_h
        ms = jnp.sum(h * h, axis=-1, keepdims=True) * inv_h
        var = jnp.maximum(ms - mu * mu, 0.0)   # guard f32 cancellation going negative
        hn = (h - mu) * jax.lax.rsqrt(var + LN_EPS)
        # gamma/beta are zero in padded lanes -> affine re-zeroes them before ReLU.
        return jnp.maximum(hn * gamma + beta, 0.0)

    # layer1 -> (dropout: identity in eval) -> layernorm -> relu
    h1 = jnp.dot(x, w1_ref[...], preferred_element_type=jnp.float32) + b1
    h1 = ln_relu(h1)

    # layer2 -> (dropout: identity in eval) -> layernorm -> relu
    h2 = jnp.dot(h1.astype(jnp.bfloat16), w2_ref[...],
                 preferred_element_type=jnp.float32) + b2
    h2 = ln_relu(h2)

    # layer3 (output Q-values, no activation)
    o_ref[...] = (jnp.dot(h2.astype(jnp.bfloat16), w3_ref[...],
                          preferred_element_type=jnp.float32) + b3_ref[...]
                  ).astype(o_ref.dtype)

    # TODO(synk): training-mode Dropout(p=0.2) (stochastic masking via
    # pltpu.prng_random_bits) is intentionally omitted — eval-mode identity used.


# ----------------------------------------------------------------------------- packing
def pack_params(params, state_dim, num_hidden_units, num_actions):
    """Per-layer lane padding; bf16 weights, one packed f32 bias/LN array + b3."""
    w1, b1, w2, b2, w3, b3, gamma, beta = params
    H = _round_up(num_hidden_units, LANE)
    A = _round_up(num_actions, LANE)
    K = state_dim                                  # contraction dim, no lane pad

    def pad_w(w, rows, cols):
        return jnp.zeros((rows, cols), jnp.float32).at[:w.shape[0], :w.shape[1]].set(w)

    w1p = pad_w(w1, K, H).astype(jnp.bfloat16)
    w2p = pad_w(w2, H, H).astype(jnp.bfloat16)
    w3p = pad_w(w3, H, A).astype(jnp.bfloat16)

    pbh = jnp.zeros((SUBLANE, H), jnp.float32)
    pbh = pbh.at[0, :num_hidden_units].set(b1.reshape(-1))
    pbh = pbh.at[1, :num_hidden_units].set(b2.reshape(-1))
    pbh = pbh.at[2, :num_hidden_units].set(gamma.reshape(-1))
    pbh = pbh.at[3, :num_hidden_units].set(beta.reshape(-1))

    b3p = jnp.zeros((1, A), jnp.float32).at[0, :num_actions].set(b3.reshape(-1))
    return w1p, w2p, w3p, pbh, b3p


# ----------------------------------------------------------------------------- wrapper
def _choose_tile(B, tile_b):
    """Pick (tile_b, padded_B) for the batch grid."""
    Bp = _round_up(max(B, 1), SUBLANE)
    if Bp <= tile_b:
        if Bp <= 64:
            return Bp, Bp                               # tiny: launch/DMA latency bound
        tb = _round_up(pl.cdiv(Bp, 2), SUBLANE)         # >=2 steps for v7x megacore
        return tb, _round_up(Bp, tb)
    return tile_b, _round_up(Bp, tile_b)


def dqn_forward(x, packed_params, *, num_hidden_units, num_actions, tile_b=512):
    """x: (B, state_dim) f32 (or bf16).  Returns (B, num_actions) f32."""
    w1p, w2p, w3p, pbh, b3p = packed_params
    K, H = w1p.shape
    A = w3p.shape[1]
    B = x.shape[0]

    tb, Bp = _choose_tile(B, tile_b)
    # bf16 input halves the only per-step DMA; pad batch (sublanes) only if needed.
    xb = x.astype(jnp.bfloat16)
    if Bp != B:
        xb = jnp.zeros((Bp, K), jnp.bfloat16).at[:B, :].set(xb)

    grid = (Bp // tb,)
    kernel = functools.partial(dqn_kernel, inv_h=1.0 / num_hidden_units)

    def _run(single_buffer_weights):
        def resident(shape):
            idx = lambda i, _n=len(shape): (0,) * _n
            if single_buffer_weights:
                return pl.BlockSpec(shape, idx, pipeline_mode=pl.Buffered(1))
            return pl.BlockSpec(shape, idx)

        in_specs = [
            pl.BlockSpec((tb, K), lambda i: (i, 0)),   # x: streamed over batch
            resident((K, H)),                          # W1 (VMEM-resident)
            resident((H, H)),                          # W2
            resident((H, A)),                          # W3
            resident((SUBLANE, H)),                    # b1/b2/gamma/beta
            resident((1, A)),                          # b3
        ]
        out_spec = pl.BlockSpec((tb, A), lambda i: (i, 0))

        # Explicit VMEM budget: weights (single/double buffered) + pipelined
        # x/out tiles + biases + headroom.  Keeps v7x (64 MiB physical) honest.
        bufs = 1 if single_buffer_weights else 2
        w_bytes = 2 * (K * H + H * H + H * A)                       # bf16
        io_bytes = 2 * (tb * K * 2 + tb * A * 4)                    # double-buffered tiles
        misc = 4 * (SUBLANE * H + A)
        need = bufs * w_bytes + io_bytes + misc + (4 << 20)
        vmem_limit = int(min(max(need, 16 << 20), 96 << 20))

        return pl.pallas_call(
            kernel,
            out_shape=jax.ShapeDtypeStruct((Bp, A), jnp.float32),
            grid=grid,
            in_specs=in_specs,
            out_specs=out_spec,
            compiler_params=pltpu.CompilerParams(
                dimension_semantics=("parallel",),   # batch axis -> both v7x TCs
                vmem_limit_bytes=vmem_limit,
            ),
        )(xb, w1p, w2p, w3p, pbh, b3p)

    try:
        out = jax.block_until_ready(_run(True))
    except Exception:
        # Fallback if pipeline_mode=pl.Buffered(1) is rejected by this jax build.
        out = _run(False)

    return out[:B, :num_actions]


# ----------------------------------------------------------------------------- params / reference
def init_params(key, state_dim, num_hidden_units, num_actions):
    """Deterministic synthetic parameters (shapes match the PyTorch module).

    Weights are stored transposed vs. PyTorch, i.e. W has shape (in, out) so the
    kernel computes x @ W + b.
    """
    ks = jax.random.split(key, 6)
    w1 = jax.random.normal(ks[0], (state_dim, num_hidden_units), jnp.float32) * 0.1
    b1 = jax.random.normal(ks[1], (1, num_hidden_units), jnp.float32) * 0.01
    w2 = jax.random.normal(ks[2], (num_hidden_units, num_hidden_units), jnp.float32) * 0.1
    b2 = jax.random.normal(ks[3], (1, num_hidden_units), jnp.float32) * 0.01
    w3 = jax.random.normal(ks[4], (num_hidden_units, num_actions), jnp.float32) * 0.1
    b3 = jax.random.normal(ks[5], (1, num_actions), jnp.float32) * 0.01
    gamma = jnp.ones((1, num_hidden_units), jnp.float32)   # LayerNorm weight init
    beta = jnp.zeros((1, num_hidden_units), jnp.float32)   # LayerNorm bias init
    return (w1, b1, w2, b2, w3, b3, gamma, beta)


def dqn_reference(x, params):
    """Pure-JAX reference of the same eval-mode forward (bf16 matmuls, f32 accum).

    NOTE: the PyTorch module runs f32 end-to-end; this kernel uses bf16 weights/
    activations on the MXU with f32 accumulation, so agreement is ~1e-2 level.
    """
    w1, b1, w2, b2, w3, b3, gamma, beta = params

    def mm(a, w):
        return jnp.dot(a.astype(jnp.bfloat16), w.astype(jnp.bfloat16),
                       preferred_element_type=jnp.float32)

    def ln_relu(h):
        mu = jnp.mean(h, axis=-1, keepdims=True)
        var = jnp.maximum(jnp.mean(h * h, axis=-1, keepdims=True) - mu * mu, 0.0)
        return jnp.maximum((h - mu) * jax.lax.rsqrt(var + LN_EPS) * gamma + beta, 0.0)

    h1 = ln_relu(mm(x, w1) + b1)
    h2 = ln_relu(mm(h1, w2) + b2)
    return mm(h2, w3) + b3


if __name__ == "__main__":
    # Small shapes consistent with the module's forward.
    state_dim = 16
    num_hidden_units = 32
    num_actions = 4

    key = jax.random.PRNGKey(0)
    kx, kp, kx2 = jax.random.split(key, 3)
    params = init_params(kp, state_dim, num_hidden_units, num_actions)
    packed = pack_params(params, state_dim, num_hidden_units, num_actions)

    # 1) tiny inference batch (single grid step)
    x = jax.random.normal(kx, (8, state_dim), jnp.float32)
    out = jax.block_until_ready(
        dqn_forward(x, packed, num_hidden_units=num_hidden_units,
                    num_actions=num_actions))
    ref = dqn_reference(x, params)
    assert out.shape == (8, num_actions)
    err = float(jnp.max(jnp.abs(out - ref)))
    assert jnp.allclose(out, ref, atol=1e-2, rtol=1e-2), f"mismatch (max abs err {err})"

    # 2) moderate batch (exercises batch padding + 2-step parallel grid)
    x2 = jax.random.normal(kx2, (200, state_dim), jnp.float32)
    out2 = jax.block_until_ready(
        dqn_forward(x2, packed, num_hidden_units=num_hidden_units,
                    num_actions=num_actions))
    ref2 = dqn_reference(x2, params)
    assert out2.shape == (200, num_actions)
    err2 = float(jnp.max(jnp.abs(out2 - ref2)))
    assert jnp.allclose(out2, ref2, atol=1e-2, rtol=1e-2), f"mismatch (max abs err {err2})"

    print("KERNEL_OK")
</pallas_src>

<mosaic_0001>
module attributes {stable_mosaic.version = 11 : i64} {
  func.func @dqn_kernel(%arg0: i32, %arg1: memref<8x16xbf16, #tpu.memory_space<vmem>>, %arg2: memref<16x128xbf16, #tpu.memory_space<vmem>>, %arg3: memref<128x128xbf16, #tpu.memory_space<vmem>>, %arg4: memref<128x128xbf16, #tpu.memory_space<vmem>>, %arg5: memref<8x128xf32, #tpu.memory_space<vmem>>, %arg6: memref<1x128xf32, #tpu.memory_space<vmem>>, %arg7: memref<8x128xf32, #tpu.memory_space<vmem>>) attributes {dimension_semantics = [#tpu.dimension_semantics<parallel>], iteration_bounds = array<i64: 1>, scalar_prefetch = 0 : i64, scratch_operands = 0 : i64, tpu.core_type = #tpu.core_type<tc>, window_params = [{transform_indices = @transform_0, window_bounds = array<i64: 8, 16>}, {pipeline_mode = #tpu.pipeline_mode<synchronous>, transform_indices = @transform_1, window_bounds = array<i64: 16, 128>}, {pipeline_mode = #tpu.pipeline_mode<synchronous>, transform_indices = @transform_2, window_bounds = array<i64: 128, 128>}, {pipeline_mode = #tpu.pipeline_mode<synchronous>, transform_indices = @transform_3, window_bounds = array<i64: 128, 128>}, {pipeline_mode = #tpu.pipeline_mode<synchronous>, transform_indices = @transform_4, window_bounds = array<i64: 8, 128>}, {pipeline_mode = #tpu.pipeline_mode<synchronous>, transform_indices = @transform_5, window_bounds = array<i64: 1, 128>}, {transform_indices = @transform_6, window_bounds = array<i64: 8, 128>}]} {
    %c0 = arith.constant 0 : index
    %c0_0 = arith.constant 0 : index
    %0 = vector.load %arg1[%c0, %c0_0] : memref<8x16xbf16, #tpu.memory_space<vmem>>, vector<8x16xbf16>
    %c0_1 = arith.constant 0 : index
    %c0_2 = arith.constant 0 : index
    %1 = vector.load %arg5[%c0_1, %c0_2] : memref<8x128xf32, #tpu.memory_space<vmem>>, vector<8x128xf32>
    %2 = vector.extract_strided_slice %1 {offsets = [0, 0], sizes = [1, 128], strides = [1, 1]} : vector<8x128xf32> to vector<1x128xf32>
    %3 = vector.extract_strided_slice %1 {offsets = [1, 0], sizes = [1, 128], strides = [1, 1]} : vector<8x128xf32> to vector<1x128xf32>
    %4 = vector.extract_strided_slice %1 {offsets = [2, 0], sizes = [1, 128], strides = [1, 1]} : vector<8x128xf32> to vector<1x128xf32>
    %5 = vector.extract_strided_slice %1 {offsets = [3, 0], sizes = [1, 128], strides = [1, 1]} : vector<8x128xf32> to vector<1x128xf32>
    %c0_3 = arith.constant 0 : index
    %c0_4 = arith.constant 0 : index
    %6 = vector.load %arg2[%c0_3, %c0_4] : memref<16x128xbf16, #tpu.memory_space<vmem>>, vector<16x128xbf16>
    %cst = arith.constant dense<0.000000e+00> : vector<8x128xf32>
    %7 = tpu.matmul %0, %6, %cst {dimension_numbers = #tpu.dot_dimension_numbers<[1], [0], [0], [1], [0, 0, 1, 1], [], []>} : vector<8x16xbf16>, vector<16x128xbf16>, vector<8x128xf32> -> vector<8x128xf32>
    %8 = vector.broadcast %2 : vector<1x128xf32> to vector<8x128xf32>
    %9 = arith.addf %7, %8 : vector<8x128xf32>
    %cst_5 = arith.constant dense<0.000000e+00> : vector<8xf32>
    %10 = vector.multi_reduction <add>, %9, %cst_5 [1] : vector<8x128xf32> to vector<8xf32>
    %11 = vector.shape_cast %10 : vector<8xf32> to vector<8x1xf32>
    %cst_6 = arith.constant 3.125000e-02 : f32
    %12 = vector.broadcast %cst_6 : f32 to vector<8x1xf32>
    %13 = arith.mulf %11, %12 : vector<8x1xf32>
    %14 = arith.mulf %9, %9 : vector<8x128xf32>
    %cst_7 = arith.constant dense<0.000000e+00> : vector<8xf32>
    %15 = vector.multi_reduction <add>, %14, %cst_7 [1] : vector<8x128xf32> to vector<8xf32>
    %16 = vector.shape_cast %15 : vector<8xf32> to vector<8x1xf32>
    %cst_8 = arith.constant 3.125000e-02 : f32
    %17 = vector.broadcast %cst_8 : f32 to vector<8x1xf32>
    %18 = arith.mulf %16, %17 : vector<8x1xf32>
    %19 = arith.mulf %13, %13 : vector<8x1xf32>
    %20 = arith.subf %18, %19 : vector<8x1xf32>
    %cst_9 = arith.constant 0.000000e+00 : f32
    %21 = vector.broadcast %cst_9 : f32 to vector<8x1xf32>
    %22 = arith.maximumf %20, %21 : vector<8x1xf32>
    %23 = vector.broadcast %13 : vector<8x1xf32> to vector<8x128xf32>
    %24 = arith.subf %9, %23 : vector<8x128xf32>
    %cst_10 = arith.constant 9.99999974E-6 : f32
    %25 = vector.broadcast %cst_10 : f32 to vector<8x1xf32>
    %26 = arith.addf %22, %25 : vector<8x1xf32>
    %27 = math.rsqrt %26 : vector<8x1xf32>
    %28 = vector.broadcast %27 : vector<8x1xf32> to vector<8x128xf32>
    %29 = arith.mulf %24, %28 : vector<8x128xf32>
    %30 = vector.broadcast %4 : vector<1x128xf32> to vector<8x128xf32>
    %31 = arith.mulf %29, %30 : vector<8x128xf32>
    %32 = vector.broadcast %5 : vector<1x128xf32> to vector<8x128xf32>
    %33 = arith.addf %31, %32 : vector<8x128xf32>
    %cst_11 = arith.constant 0.000000e+00 : f32
    %34 = vector.broadcast %cst_11 : f32 to vector<8x128xf32>
    %35 = arith.maximumf %33, %34 : vector<8x128xf32>
    %36 = arith.truncf %35 : vector<8x128xf32> to vector<8x128xbf16>
    %c0_12 = arith.constant 0 : index
    %c0_13 = arith.constant 0 : index
    %37 = vector.load %arg3[%c0_12, %c0_13] : memref<128x128xbf16, #tpu.memory_space<vmem>>, vector<128x128xbf16>
    %cst_14 = arith.constant dense<0.000000e+00> : vector<8x128xf32>
    %38 = tpu.matmul %36, %37, %cst_14 {dimension_numbers = #tpu.dot_dimension_numbers<[1], [0], [0], [1], [0, 0, 1, 1], [], []>} : vector<8x128xbf16>, vector<128x128xbf16>, vector<8x128xf32> -> vector<8x128xf32>
    %39 = vector.broadcast %3 : vector<1x128xf32> to vector<8x128xf32>
    %40 = arith.addf %38, %39 : vector<8x128xf32>
    %cst_15 = arith.constant dense<0.000000e+00> : vector<8xf32>
    %41 = vector.multi_reduction <add>, %40, %cst_15 [1] : vector<8x128xf32> to vector<8xf32>
    %42 = vector.shape_cast %41 : vector<8xf32> to vector<8x1xf32>
    %cst_16 = arith.constant 3.125000e-02 : f32
    %43 = vector.broadcast %cst_16 : f32 to vector<8x1xf32>
    %44 = arith.mulf %42, %43 : vector<8x1xf32>
    %45 = arith.mulf %40, %40 : vector<8x128xf32>
    %cst_17 = arith.constant dense<0.000000e+00> : vector<8xf32>
    %46 = vector.multi_reduction <add>, %45, %cst_17 [1] : vector<8x128xf32> to vector<8xf32>
    %47 = vector.shape_cast %46 : vector<8xf32> to vector<8x1xf32>
    %cst_18 = arith.constant 3.125000e-02 : f32
    %48 = vector.broadcast %cst_18 : f32 to vector<8x1xf32>
    %49 = arith.mulf %47, %48 : vector<8x1xf32>
    %50 = arith.mulf %44, %44 : vector<8x1xf32>
    %51 = arith.subf %49, %50 : vector<8x1xf32>
    %cst_19 = arith.constant 0.000000e+00 : f32
    %52 = vector.broadcast %cst_19 : f32 to vector<8x1xf32>
    %53 = arith.maximumf %51, %52 : vector<8x1xf32>
    %54 = vector.broadcast %44 : vector<8x1xf32> to vector<8x128xf32>
    %55 = arith.subf %40, %54 : vector<8x128xf32>
    %cst_20 = arith.constant 9.99999974E-6 : f32
    %56 = vector.broadcast %cst_20 : f32 to vector<8x1xf32>
    %57 = arith.addf %53, %56 : vector<8x1xf32>
    %58 = math.rsqrt %57 : vector<8x1xf32>
    %59 = vector.broadcast %58 : vector<8x1xf32> to vector<8x128xf32>
    %60 = arith.mulf %55, %59 : vector<8x128xf32>
    %61 = vector.broadcast %4 : vector<1x128xf32> to vector<8x128xf32>
    %62 = arith.mulf %60, %61 : vector<8x128xf32>
    %63 = vector.broadcast %5 : vector<1x128xf32> to vector<8x128xf32>
    %64 = arith.addf %62, %63 : vector<8x128xf32>
    %cst_21 = arith.constant 0.000000e+00 : f32
    %65 = vector.broadcast %cst_21 : f32 to vector<8x128xf32>
    %66 = arith.maximumf %64, %65 : vector<8x128xf32>
    %67 = arith.truncf %66 : vector<8x128xf32> to vector<8x128xbf16>
    %c0_22 = arith.constant 0 : index
    %c0_23 = arith.constant 0 : index
    %68 = vector.load %arg4[%c0_22, %c0_23] : memref<128x128xbf16, #tpu.memory_space<vmem>>, vector<128x128xbf16>
    %cst_24 = arith.constant dense<0.000000e+00> : vector<8x128xf32>
    %69 = tpu.matmul %67, %68, %cst_24 {dimension_numbers = #tpu.dot_dimension_numbers<[1], [0], [0], [1], [0, 0, 1, 1], [], []>} : vector<8x128xbf16>, vector<128x128xbf16>, vector<8x128xf32> -> vector<8x128xf32>
    %c0_25 = arith.constant 0 : index
    %c0_26 = arith.constant 0 : index
    %70 = vector.load %arg6[%c0_25, %c0_26] : memref<1x128xf32, #tpu.memory_space<vmem>>, vector<1x128xf32>
    %71 = vector.broadcast %70 : vector<1x128xf32> to vector<8x128xf32>
    %72 = arith.addf %69, %71 : vector<8x128xf32>
    %c0_27 = arith.constant 0 : index
    %c0_28 = arith.constant 0 : index
    %73 = vector.load %arg7[%c0_27, %c0_28] : memref<8x128xf32, #tpu.memory_space<vmem>>, vector<8x128xf32>
    tpu.vector_store %arg7[%c0_27, %c0_28], %72 {strides = array<i32>} : memref<8x128xf32, #tpu.memory_space<vmem>>, vector<8x128xf32>,
    return
  }
  func.func @transform_0(%arg0: i32) -> (i32, i32) {
    %c0_i32 = arith.constant 0 : i32
    %c0_i32_0 = arith.constant 0 : i32
    return %arg0, %c0_i32 : i32, i32
  }
  func.func @transform_1(%arg0: i32) -> (i32, i32) {
    %c0_i32 = arith.constant 0 : i32
    %c0_i32_0 = arith.constant 0 : i32
    %c0_i32_1 = arith.constant 0 : i32
    return %c0_i32, %c0_i32_0 : i32, i32
  }
  func.func @transform_2(%arg0: i32) -> (i32, i32) {
    %c0_i32 = arith.constant 0 : i32
    %c0_i32_0 = arith.constant 0 : i32
    %c0_i32_1 = arith.constant 0 : i32
    return %c0_i32, %c0_i32_0 : i32, i32
  }
  func.func @transform_3(%arg0: i32) -> (i32, i32) {
    %c0_i32 = arith.constant 0 : i32
    %c0_i32_0 = arith.constant 0 : i32
    %c0_i32_1 = arith.constant 0 : i32
    return %c0_i32, %c0_i32_0 : i32, i32
  }
  func.func @transform_4(%arg0: i32) -> (i32, i32) {
    %c0_i32 = arith.constant 0 : i32
    %c0_i32_0 = arith.constant 0 : i32
    %c0_i32_1 = arith.constant 0 : i32
    return %c0_i32, %c0_i32_0 : i32, i32
  }
  func.func @transform_5(%arg0: i32) -> (i32, i32) {
    %c0_i32 = arith.constant 0 : i32
    %c0_i32_0 = arith.constant 0 : i32
    %c0_i32_1 = arith.constant 0 : i32
    return %c0_i32, %c0_i32_0 : i32, i32
  }
  func.func @transform_6(%arg0: i32) -> (i32, i32) {
    %c0_i32 = arith.constant 0 : i32
    %c0_i32_0 = arith.constant 0 : i32
    return %arg0, %c0_i32 : i32, i32
  }
}

module attributes {stable_mosaic.version = 11 : i64} {
  func.func @dqn_kernel(%arg0: i32, %arg1: memref<8x16xbf16, #tpu.memory_space<vmem>>, %arg2: memref<16x128xbf16, #tpu.memory_space<vmem>>, %arg3: memref<128x128xbf16, #tpu.memory_space<vmem>>, %arg4: memref<128x128xbf16, #tpu.memory_space<vmem>>, %arg5: memref<8x128xf32, #tpu.memory_space<vmem>>, %arg6: memref<1x128xf32, #tpu.memory_space<vmem>>, %arg7: memref<8x128xf32, #tpu.memory_space<vmem>>) attributes {dimension_semantics = [#tpu.dimension_semantics<parallel>], iteration_bounds = array<i64: 1>, scalar_prefetch = 0 : i64, scratch_operands = 0 : i64, tpu.core_type = #tpu.core_type<tc>, window_params = [{transform_indices = @transform_0, window_bounds = array<i64: 8, 16>}, {pipeline_mode = #tpu.pipeline_mode<synchronous>, transform_indices = @transform_1, window_bounds = array<i64: 16, 128>}, {pipeline_mode = #tpu.pipeline_mode<synchronous>, transform_indices = @transform_2, window_bounds = array<i64: 128, 128>}, {pipeline_mode = #tpu.pipeline_mode<synchronous>, transform_indices = @transform_3, window_bounds = array<i64: 128, 128>}, {pipeline_mode = #tpu.pipeline_mode<synchronous>, transform_indices = @transform_4, window_bounds = array<i64: 8, 128>}, {pipeline_mode = #tpu.pipeline_mode<synchronous>, transform_indices = @transform_5, window_bounds = array<i64: 1, 128>}, {transform_indices = @transform_6, window_bounds = array<i64: 8, 128>}]} {
    %c0 = arith.constant 0 : index
    %c0_0 = arith.constant 0 : index
    %0 = vector.load %arg1[%c0, %c0_0] : memref<8x16xbf16, #tpu.memory_space<vmem>>, vector<8x16xbf16>
    %c0_1 = arith.constant 0 : index
    %c0_2 = arith.constant 0 : index
    %1 = vector.load %arg5[%c0_1, %c0_2] : memref<8x128xf32, #tpu.memory_space<vmem>>, vector<8x128xf32>
    %2 = vector.extract_strided_slice %1 {offsets = [0, 0], sizes = [1, 128], strides = [1, 1]} : vector<8x128xf32> to vector<1x128xf32>
    %3 = vector.extract_strided_slice %1 {offsets = [1, 0], sizes = [1, 128], strides = [1, 1]} : vector<8x128xf32> to vector<1x128xf32>
    %4 = vector.extract_strided_slice %1 {offsets = [2, 0], sizes = [1, 128], strides = [1, 1]} : vector<8x128xf32> to vector<1x128xf32>
    %5 = vector.extract_strided_slice %1 {offsets = [3, 0], sizes = [1, 128], strides = [1, 1]} : vector<8x128xf32> to vector<1x128xf32>
    %c0_3 = arith.constant 0 : index
    %c0_4 = arith.constant 0 : index
    %6 = vector.load %arg2[%c0_3, %c0_4] : memref<16x128xbf16, #tpu.memory_space<vmem>>, vector<16x128xbf16>
    %cst = arith.constant dense<0.000000e+00> : vector<8x128xf32>
    %7 = tpu.matmul %0, %6, %cst {dimension_numbers = #tpu.dot_dimension_numbers<[1], [0], [0], [1], [0, 0, 1, 1], [], []>} : vector<8x16xbf16>, vector<16x128xbf16>, vector<8x128xf32> -> vector<8x128xf32>
    %8 = vector.broadcast %2 : vector<1x128xf32> to vector<8x128xf32>
    %9 = arith.addf %7, %8 : vector<8x128xf32>
    %cst_5 = arith.constant dense<0.000000e+00> : vector<8xf32>
    %10 = vector.multi_reduction <add>, %9, %cst_5 [1] : vector<8x128xf32> to vector<8xf32>
    %11 = vector.shape_cast %10 : vector<8xf32> to vector<8x1xf32>
    %cst_6 = arith.constant 3.125000e-02 : f32
    %12 = vector.broadcast %cst_6 : f32 to vector<8x1xf32>
    %13 = arith.mulf %11, %12 : vector<8x1xf32>
    %14 = arith.mulf %9, %9 : vector<8x128xf32>
    %cst_7 = arith.constant dense<0.000000e+00> : vector<8xf32>
    %15 = vector.multi_reduction <add>, %14, %cst_7 [1] : vector<8x128xf32> to vector<8xf32>
    %16 = vector.shape_cast %15 : vector<8xf32> to vector<8x1xf32>
    %cst_8 = arith.constant 3.125000e-02 : f32
    %17 = vector.broadcast %cst_8 : f32 to vector<8x1xf32>
    %18 = arith.mulf %16, %17 : vector<8x1xf32>
    %19 = arith.mulf %13, %13 : vector<8x1xf32>
    %20 = arith.subf %18, %19 : vector<8x1xf32>
    %cst_9 = arith.constant 0.000000e+00 : f32
    %21 = vector.broadcast %cst_9 : f32 to vector<8x1xf32>
    %22 = arith.maximumf %20, %21 : vector<8x1xf32>
    %23 = vector.broadcast %13 : vector<8x1xf32> to vector<8x128xf32>
    %24 = arith.subf %9, %23 : vector<8x128xf32>
    %cst_10 = arith.constant 9.99999974E-6 : f32
    %25 = vector.broadcast %cst_10 : f32 to vector<8x1xf32>
    %26 = arith.addf %22, %25 : vector<8x1xf32>
    %27 = math.rsqrt %26 : vector<8x1xf32>
    %28 = vector.broadcast %27 : vector<8x1xf32> to vector<8x128xf32>
    %29 = arith.mulf %24, %28 : vector<8x128xf32>
    %30 = vector.broadcast %4 : vector<1x128xf32> to vector<8x128xf32>
    %31 = arith.mulf %29, %30 : vector<8x128xf32>
    %32 = vector.broadcast %5 : vector<1x128xf32> to vector<8x128xf32>
    %33 = arith.addf %31, %32 : vector<8x128xf32>
    %cst_11 = arith.constant 0.000000e+00 : f32
    %34 = vector.broadcast %cst_11 : f32 to vector<8x128xf32>
    %35 = arith.maximumf %33, %34 : vector<8x128xf32>
    %36 = arith.truncf %35 : vector<8x128xf32> to vector<8x128xbf16>
    %c0_12 = arith.constant 0 : index
    %c0_13 = arith.constant 0 : index
    %37 = vector.load %arg3[%c0_12, %c0_13] : memref<128x128xbf16, #tpu.memory_space<vmem>>, vector<128x128xbf16>
    %cst_14 = arith.constant dense<0.000000e+00> : vector<8x128xf32>
    %38 = tpu.matmul %36, %37, %cst_14 {dimension_numbers = #tpu.dot_dimension_numbers<[1], [0], [0], [1], [0, 0, 1, 1], [], []>} : vector<8x128xbf16>, vector<128x128xbf16>, vector<8x128xf32> -> vector<8x128xf32>
    %39 = vector.broadcast %3 : vector<1x128xf32> to vector<8x128xf32>
    %40 = arith.addf %38, %39 : vector<8x128xf32>
    %cst_15 = arith.constant dense<0.000000e+00> : vector<8xf32>
    %41 = vector.multi_reduction <add>, %40, %cst_15 [1] : vector<8x128xf32> to vector<8xf32>
    %42 = vector.shape_cast %41 : vector<8xf32> to vector<8x1xf32>
    %cst_16 = arith.constant 3.125000e-02 : f32
    %43 = vector.broadcast %cst_16 : f32 to vector<8x1xf32>
    %44 = arith.mulf %42, %43 : vector<8x1xf32>
    %45 = arith.mulf %40, %40 : vector<8x128xf32>
    %cst_17 = arith.constant dense<0.000000e+00> : vector<8xf32>
    %46 = vector.multi_reduction <add>, %45, %cst_17 [1] : vector<8x128xf32> to vector<8xf32>
    %47 = vector.shape_cast %46 : vector<8xf32> to vector<8x1xf32>
    %cst_18 = arith.constant 3.125000e-02 : f32
    %48 = vector.broadcast %cst_18 : f32 to vector<8x1xf32>
    %49 = arith.mulf %47, %48 : vector<8x1xf32>
    %50 = arith.mulf %44, %44 : vector<8x1xf32>
    %51 = arith.subf %49, %50 : vector<8x1xf32>
    %cst_19 = arith.constant 0.000000e+00 : f32
    %52 = vector.broadcast %cst_19 : f32 to vector<8x1xf32>
    %53 = arith.maximumf %51, %52 : vector<8x1xf32>
    %54 = vector.broadcast %44 : vector<8x1xf32> to vector<8x128xf32>
    %55 = arith.subf %40, %54 : vector<8x128xf32>
    %cst_20 = arith.constant 9.99999974E-6 : f32
    %56 = vector.broadcast %cst_20 : f32 to vector<8x1xf32>
    %57 = arith.addf %53, %56 : vector<8x1xf32>
    %58 = math.rsqrt %57 : vector<8x1xf32>
    %59 = vector.broadcast %58 : vector<8x1xf32> to vector<8x128xf32>
    %60 = arith.mulf %55, %59 : vector<8x128xf32>
    %61 = vector.broadcast %4 : vector<1x128xf32> to vector<8x128xf32>
    %62 = arith.mulf %60, %61 : vector<8x128xf32>
    %63 = vector.broadcast %5 : vector<1x128xf32> to vector<8x128xf32>
    %64 = arith.addf %62, %63 : vector<8x128xf32>
    %cst_21 = arith.constant 0.000000e+00 : f32
    %65 = vector.broadcast %cst_21 : f32 to vector<8x128xf32>
    %66 = arith.maximumf %64, %65 : vector<8x128xf32>
    %67 = arith.truncf %66 : vector<8x128xf32> to vector<8x128xbf16>
    %c0_22 = arith.constant 0 : index
    %c0_23 = arith.constant 0 : index
    %68 = vector.load %arg4[%c0_22, %c0_23] : memref<128x128xbf16, #tpu.memory_space<vmem>>, vector<128x128xbf16>
    %cst_24 = arith.constant dense<0.000000e+00> : vector<8x128xf32>
    %69 = tpu.matmul %67, %68, %cst_24 {dimension_numbers = #tpu.dot_dimension_numbers<[1], [0], [0], [1], [0, 0, 1, 1], [], []>} : vector<8x128xbf16>, vector<128x128xbf16>, vector<8x128xf32> -> vector<8x128xf32>
    %c0_25 = arith.constant 0 : index
    %c0_26 = arith.constant 0 : index
    %70 = vector.load %arg6[%c0_25, %c0_26] : memref<1x128xf32, #tpu.memory_space<vmem>>, vector<1x128xf32>
    %71 = vector.broadcast %70 : vector<1x128xf32> to vector<8x128xf32>
    %72 = arith.addf %69, %71 : vector<8x128xf32>
    %c0_27 = arith.constant 0 : index
    %c0_28 = arith.constant 0 : index
    %73 = vector.load %arg7[%c0_27, %c0_28] : memref<8x128xf32, #tpu.memory_space<vmem>>, vector<8x128xf32>
    tpu.vector_store %arg7[%c0_27, %c0_28], %72 {strides = array<i32>} : memref<8x128xf32, #tpu.memory_space<vmem>>, vector<8x128xf32>,
    return
  }
  func.func @transform_0(%arg0: i32) -> (i32, i32) {
    %c0_i32 = arith.constant 0 : i32
    %c0_i32_0 = arith.constant 0 : i32
    return %arg0, %c0_i32 : i32, i32
  }
  func.func @transform_1(%arg0: i32) -> (i32, i32) {
    %c0_i32 = arith.constant 0 : i32
    %c0_i32_0 = arith.constant 0 : i32
    %c0_i32_1 = arith.constant 0 : i32
    return %c0_i32, %c0_i32_0 : i32, i32
  }
  func.func @transform_2(%arg0: i32) -> (i32, i32) {
    %c0_i32 = arith.constant 0 : i32
    %c0_i32_0 = arith.constant 0 : i32
    %c0_i32_1 = arith.constant 0 : i32
    return %c0_i32, %c0_i32_0 : i32, i32
  }
  func.func @transform_3(%arg0: i32) -> (i32, i32) {
    %c0_i32 = arith.constant 0 : i32
    %c0_i32_0 = arith.constant 0 : i32
    %c0_i32_1 = arith.constant 0 : i32
    return %c0_i32, %c0_i32_0 : i32, i32
  }
  func.func @transform_4(%arg0: i32) -> (i32, i32) {
    %c0_i32 = arith.constant 0 : i32
    %c0_i32_0 = arith.constant 0 : i32
    %c0_i32_1 = arith.constant 0 : i32
    return %c0_i32, %c0_i32_0 : i32, i32
  }
  func.func @transform_5(%arg0: i32) -> (i32, i32) {
    %c0_i32 = arith.constant 0 : i32
    %c0_i32_0 = arith.constant 0 : i32
    %c0_i32_1 = arith.constant 0 : i32
    return %c0_i32, %c0_i32_0 : i32, i32
  }
  func.func @transform_6(%arg0: i32) -> (i32, i32) {
    %c0_i32 = arith.constant 0 : i32
    %c0_i32_0 = arith.constant 0 : i32
    return %arg0, %c0_i32 : i32, i32
  }
}

</mosaic_0001>

<llo_original>
// kernel: tpu_custom_call.1
$region0: #{tpu_custom_call.1}
  #allocation0 [shape = 'u32[]', space=smem, size = 0x4, offset = 0x4, fixed_abs, tag = 'smem constant byte address 0x4 - core index']
  #allocation1 [shape = 'u32[144,128]{1,0:T(1,128)}', space=vmem, size = 0x12000, scoped, tag = 'internal scratch']
  %s0 = inlined_call_operand.hbm [shape: bf16[8,16], index: 0, kind: input, shape index: {}]
  %s1 = inlined_call_operand.hbm [shape: bf16[16,128], index: 1, kind: input, shape index: {}]
  %s2 = inlined_call_operand.hbm [shape: bf16[128,128], index: 2, kind: input, shape index: {}]
  %s3 = inlined_call_operand.hbm [shape: bf16[128,128], index: 3, kind: input, shape index: {}]
  %s4 = inlined_call_operand.vmem [shape: f32[8,128], index: 4, kind: input, shape index: {}]
  %s5 = inlined_call_operand.vmem [shape: f32[1,128], index: 5, kind: input, shape index: {}]
  %s6 = inlined_call_operand.hbm [shape: f32[8,128], index: 6, kind: output, shape index: {}]
  %s7 = sld [smem:[#allocation0]]
  $region50: #{tpu_custom_call.1} parent=0
    _
  %s9 = ssub.s32 1, %s7
  %s10 = scalar_select 0, %s9, %s7
  $region1: #{tpu_custom_call.1} parent=0
    #allocation2 [shape = 'u8[2048]{0}', space=vmem, size = 0x800, scoped, tag = 'input window, operand 0, single buffered']
    #allocation3 [shape = 's32[1]{0}', space=sflag, size = 0x4, scoped, tag = 'scoped memory for tpu_custom_call.1']
    #allocation4 [shape = 's32[1]{0}', space=sflag, size = 0x4, scoped, tag = 'scoped memory for tpu_custom_call.1']
    #allocation5 [shape = 'u8[4096]{0}', space=vmem, size = 0x1000, scoped, tag = 'input window, operand 1, single buffered']
    #allocation6 [shape = 's32[1]{0}', space=sflag, size = 0x4, scoped, tag = 'scoped memory for tpu_custom_call.1']
    #allocation7 [shape = 'u8[32768]{0}', space=vmem, size = 0x8000, scoped, tag = 'input window, operand 2, single buffered']
    #allocation8 [shape = 'u8[32768]{0}', space=vmem, size = 0x8000, scoped, tag = 'input window, operand 3, single buffered']
    #allocation9 [shape = 's32[1]{0}', space=sflag, size = 0x4, scoped, tag = 'scoped memory for tpu_custom_call.1']
    #allocation10 [shape = 'u8[4096]{0}', space=vmem, size = 0x1000, scoped, tag = 'output window, operand 0, single buffered']
    %11 = vsyncpa [#allocation3], 0
    %12 = vsyncpa [#allocation6], 0
    %13 = vsyncpa [#allocation9], 0
    %14 = vsyncpa [#allocation4], 0
    // Predicated region
    $region2: #{tpu_custom_call.1} parent=1 // pred_check
      _
    $region3: #{tpu_custom_call.1} parent=1 // pred_check_branch
      %16 = sbr.rel (0) target = $region5
    $region4: #{tpu_custom_call.1} parent=1 // pred_region
      %s18 = ssub.s32 64, 64
      %19 = vsyncadd [#allocation3], %s18
      %s21 = sshll.u32 [#allocation2], 4
      %s22 = int_to_ptr.vmem [resolvable:$true] %s21
      %24 = dma.hbm_to_vmem [thread:$0]  %s0, 64, %s22, [#allocation3]
    $region5: #{tpu_custom_call.1} parent=1 // pred_fallthru
      _
    // Predicated region
    $region6: #{tpu_custom_call.1} parent=1 // pred_check
      _
    $region7: #{tpu_custom_call.1} parent=1 // pred_check_branch
      %26 = sbr.rel (0) target = $region9
    $region8: #{tpu_custom_call.1} parent=1 // pred_region
      %s28 = ssub.s32 128, 128
      %29 = vsyncadd [#allocation6], %s28
      %s30 = sshll.u32 [#allocation5], 4
      %s31 = int_to_ptr.vmem [resolvable:$true] %s30
      %36 = dma.hbm_to_vmem [thread:$0]  %s1, 128, %s31, [#allocation6], 64, 64, 4
    $region9: #{tpu_custom_call.1} parent=1 // pred_fallthru
      _
    // Predicated region
    $region10: #{tpu_custom_call.1} parent=1 // pred_check
      _
    $region11: #{tpu_custom_call.1} parent=1 // pred_check_branch
      %38 = sbr.rel (0) target = $region13
    $region12: #{tpu_custom_call.1} parent=1 // pred_region
      %s40 = ssub.s32 1024, 1024
      %41 = vsyncadd [#allocation6], %s40
      %s42 = sshll.u32 [#allocation7], 4
      %s43 = int_to_ptr.vmem [resolvable:$true] %s42
      %48 = dma.hbm_to_vmem [thread:$0]  %s2, 1024, %s43, [#allocation6], 64, 64, 4
    $region13: #{tpu_custom_call.1} parent=1 // pred_fallthru
      _
    // Predicated region
    $region14: #{tpu_custom_call.1} parent=1 // pred_check
      _
    $region15: #{tpu_custom_call.1} parent=1 // pred_check_branch
      %50 = sbr.rel (0) target = $region17
    $region16: #{tpu_custom_call.1} parent=1 // pred_region
      %s52 = ssub.s32 1024, 1024
      %53 = vsyncadd [#allocation9], %s52
      %s54 = sshll.u32 [#allocation8], 4
      %s55 = int_to_ptr.vmem [resolvable:$true] %s54
      %60 = dma.hbm_to_vmem [thread:$0]  %s3, 1024, %s55, [#allocation9], 64, 64, 4
    $region17: #{tpu_custom_call.1} parent=1 // pred_fallthru
      _
    // Predicated region
    $region18: #{tpu_custom_call.1} parent=1 // pred_check
      _
    $region19: #{tpu_custom_call.1} parent=1 // pred_check_branch
      %62 = sbr.rel (0) target = $region21
    $region20: #{tpu_custom_call.1} parent=1 // pred_region
      _
    $region21: #{tpu_custom_call.1} parent=1 // pred_fallthru
      _
    // Predicated region
    $region22: #{tpu_custom_call.1} parent=1 // pred_check
      _
    $region23: #{tpu_custom_call.1} parent=1 // pred_check_branch
      %64 = sbr.rel (0) target = $region25
    $region24: #{tpu_custom_call.1} parent=1 // pred_region
      _
    $region25: #{tpu_custom_call.1} parent=1 // pred_fallthru
      _
    // Predicated region
    $region26: #{tpu_custom_call.1} parent=1 // pred_check
      _
    $region27: #{tpu_custom_call.1} parent=1 // pred_check_branch
      %66 = sbr.rel (0) target = $region29
    $region28: #{tpu_custom_call.1} parent=1 // pred_region
      %67 = dma.done [#allocation3], 64
    $region29: #{tpu_custom_call.1} parent=1 // pred_fallthru
      _
    // Predicated region
    $region30: #{tpu_custom_call.1} parent=1 // pred_check
      _
    $region31: #{tpu_custom_call.1} parent=1 // pred_check_branch
      %69 = sbr.rel (0) target = $region33
    $region32: #{tpu_custom_call.1} parent=1 // pred_region
      %70 = dma.done [#allocation6], 128
    $region33: #{tpu_custom_call.1} parent=1 // pred_fallthru
      _
    // Predicated region
    $region34: #{tpu_custom_call.1} parent=1 // pred_check
      _
    $region35: #{tpu_custom_call.1} parent=1 // pred_check_branch
      %72 = sbr.rel (0) target = $region37
    $region36: #{tpu_custom_call.1} parent=1 // pred_region
      %73 = dma.done [#allocation6], 1024
    $region37: #{tpu_custom_call.1} parent=1 // pred_fallthru
      _
    // Predicated region
    $region38: #{tpu_custom_call.1} parent=1 // pred_check
      _
    $region39: #{tpu_custom_call.1} parent=1 // pred_check_branch
      %75 = sbr.rel (0) target = $region41
    $region40: #{tpu_custom_call.1} parent=1 // pred_region
      %76 = dma.done [#allocation9], 1024
    $region41: #{tpu_custom_call.1} parent=1 // pred_fallthru
      _
    %v78 = vld [vmem:[#allocation2] sm:$0xf]
    %v79 = vld [vmem:[%s4] sm:$0xff]
    %v80 = vld [vmem:[#allocation5] sm:$0xf]
    %v81 = vld [vmem:[#allocation5 + $0x4] sm:$0xf]
    %v82 = vlaneseq
    %v83 = vshrl.u32 %v82, 7
    %v84 = vsub.s32 0, %v83
    %v85 = vrot.slane %v79, %v84
    %v88 = vunpack.c.l.b16 %v80
    %v89 = vunpack.c.l.b16 %v81
    %v90 = vpack.c.b16 %v89, %v88
    %vm92 = vcmask 130048
    %v94 = vsel %vm92, %v78, 0
    %96 = vmatprep.subr.bf16.mxu0 0
    %97 = vmatpush1.bf16.msra.mxu0 %v90
    %98 = vmatprep.subr.bf16.mxu0 0
    %99 = vmatpush1.bf16.msra.mxu0 0
    %100 = vmatprep.subr.bf16.mxu0 0
    %101 = vmatpush1.bf16.msra.mxu0 0
    %102 = vmatprep.subr.bf16.mxu0 0
    %103 = vmatpush1.bf16.msra.mxu0 0
    %104 = vmatprep.subr.bf16.mxu0 0
    %105 = vmatpush1.bf16.msra.mxu0 0
    %106 = vmatprep.subr.bf16.mxu0 0
    %107 = vmatpush1.bf16.msra.mxu0 0
    %108 = vmatprep.subr.bf16.mxu0 0
    %109 = vmatpush1.bf16.msra.mxu0 0
    %110 = vmatprep.subr.bf16.mxu0 0
    %111 = vmatpush1.bf16.msra.mxu0 0
    %112 = vmatprep.subr.bf16.mxu0 0
    %113 = vmatpush1.bf16.msra.mxu0 0
    %114 = vmatprep.subr.bf16.mxu0 0
    %115 = vmatpush1.bf16.msra.mxu0 0
    %116 = vmatprep.subr.bf16.mxu0 0
    %117 = vmatpush1.bf16.msra.mxu0 0
    %118 = vmatprep.subr.bf16.mxu0 0
    %119 = vmatpush1.bf16.msra.mxu0 0
    %120 = vmatprep.subr.bf16.mxu0 0
    %121 = vmatpush1.bf16.msra.mxu0 0
    %122 = vmatprep.subr.bf16.mxu0 0
    %123 = vmatpush1.bf16.msra.mxu0 0
    %124 = vmatprep.subr.bf16.mxu0 0
    %125 = vmatpush1.bf16.msra.mxu0 0
    %126 = vmatprep.subr.bf16.mxu0 0
    %127 = vmatpush1.bf16.msra.mxu0 0
    %128 = vmatprep.mubr.bf16.mxu0 0
    %129 = vmatmul.mubr.bf16.gmra.mrb[0].mxu0 %v94
    %v130 = vpop.f32.mrb[0].mxu0
    %v131 = vadd.f32 %v85, %v130
    %v132 = vpop.f32.mrb[0].mxu0
    %v133 = vpop.f32.mrb[0].mxu0
    %v134 = vpop.f32.mrb[0].mxu0
    %135 = vdwg.mxu0
    %136 = vadd.xlane.f32.xlu0 %v131
    %v137 = vpop.xlane.xlu0 %136
    %v138 = vmul.f32 %v137, 0.03125
    %v139 = vmul.f32 %v131, %v131
    %140 = vadd.xlane.f32.xlu0 %v139
    %v141 = vpop.xlane.xlu0 %140
    %v142 = vmul.f32 %v141, 0.03125
    %v143 = vmul.f32 %v138, %v138
    %v144 = vsub.f32 %v142, %v143
    %v145 = vmax.f32 %v144, 0.0
    %v146 = vsub.f32 %v131, %v138
    %v147 = vadd.f32 %v145, 1e-05
    %v148 = vrsqrt.pop %v147
    %v149 = vmul.f32 %v146, %v148
    %v150 = vlaneseq
    %v151 = vshrl.u32 %v150, 7
    %v152 = vsub.s32 2, %v151
    %v153 = vrot.slane %v79, %v152
    %v154 = vmul.f32 %v149, %v153
    %v155 = vlaneseq
    %v156 = vshrl.u32 %v155, 7
    %v157 = vsub.s32 3, %v156
    %v158 = vrot.slane %v79, %v157
    %v159 = vadd.f32 %v154, %v158
    %v160 = vmax.f32 %v159, 0.0
    %v161 = vpack.c.bf16 %v160, %v160
    %v162 = vld [vmem:[#allocation7] sm:$0xf]
    %v163 = vld [vmem:[#allocation7 + $0x4] sm:$0xf]
    %v164 = vld [vmem:[#allocation7 + $0x8] sm:$0xf]
    %v165 = vld [vmem:[#allocation7 + $0xc] sm:$0xf]
    %v166 = vld [vmem:[#allocation7 + $0x10] sm:$0xf]
    %v167 = vld [vmem:[#allocation7 + $0x14] sm:$0xf]
    %v168 = vld [vmem:[#allocation7 + $0x18] sm:$0xf]
    %v169 = vld [vmem:[#allocation7 + $0x1c] sm:$0xf]
    %v170 = vld [vmem:[#allocation7 + $0x20] sm:$0xf]
    %v171 = vld [vmem:[#allocation7 + $0x24] sm:$0xf]
    %v172 = vld [vmem:[#allocation7 + $0x28] sm:$0xf]
    %v173 = vld [vmem:[#allocation7 + $0x2c] sm:$0xf]
    %v174 = vld [vmem:[#allocation7 + $0x30] sm:$0xf]
    %v175 = vld [vmem:[#allocation7 + $0x34] sm:$0xf]
    %v176 = vld [vmem:[#allocation7 + $0x38] sm:$0xf]
    %v177 = vld [vmem:[#allocation7 + $0x3c] sm:$0xf]
    %v178 = vlaneseq
    %v179 = vshrl.u32 %v178, 7
    %v180 = vsub.s32 1, %v179
    %v181 = vrot.slane %v79, %v180
    %v198 = vunpack.c.l.b16 %v162
    %v199 = vunpack.c.l.b16 %v163
    %v200 = vunpack.c.l.b16 %v164
    %v201 = vunpack.c.l.b16 %v165
    %v202 = vunpack.c.l.b16 %v166
    %v203 = vunpack.c.l.b16 %v167
    %v204 = vunpack.c.l.b16 %v168
    %v205 = vunpack.c.l.b16 %v169
    %v206 = vunpack.c.l.b16 %v170
    %v207 = vunpack.c.l.b16 %v171
    %v208 = vunpack.c.l.b16 %v172
    %v209 = vunpack.c.l.b16 %v173
    %v210 = vunpack.c.l.b16 %v174
    %v211 = vunpack.c.l.b16 %v175
    %v212 = vunpack.c.l.b16 %v176
    %v213 = vunpack.c.l.b16 %v177
    %v214 = vpack.c.b16 %v199, %v198
    %v215 = vpack.c.b16 %v201, %v200
    %v216 = vpack.c.b16 %v203, %v202
    %v217 = vpack.c.b16 %v205, %v204
    %v218 = vpack.c.b16 %v207, %v206
    %v219 = vpack.c.b16 %v209, %v208
    %v220 = vpack.c.b16 %v211, %v210
    %v221 = vpack.c.b16 %v213, %v212
    %230 = vmatprep.subr.bf16.mxu0 0
    %231 = vmatpush1.bf16.msra.mxu0 %v214
    %232 = vmatprep.subr.bf16.mxu0 0
    %233 = vmatpush1.bf16.msra.mxu0 %v215
    %234 = vmatprep.subr.bf16.mxu0 0
    %235 = vmatpush1.bf16.msra.mxu0 %v216
    %236 = vmatprep.subr.bf16.mxu0 0
    %237 = vmatpush1.bf16.msra.mxu0 %v217
    %238 = vmatprep.subr.bf16.mxu0 0
    %239 = vmatpush1.bf16.msra.mxu0 %v218
    %240 = vmatprep.subr.bf16.mxu0 0
    %241 = vmatpush1.bf16.msra.mxu0 %v219
    %242 = vmatprep.subr.bf16.mxu0 0
    %243 = vmatpush1.bf16.msra.mxu0 %v220
    %244 = vmatprep.subr.bf16.mxu0 0
    %245 = vmatpush1.bf16.msra.mxu0 %v221
    %246 = vmatprep.subr.bf16.mxu0 0
    %247 = vmatpush1.bf16.msra.mxu0 0
    %248 = vmatprep.subr.bf16.mxu0 0
    %249 = vmatpush1.bf16.msra.mxu0 0
    %250 = vmatprep.subr.bf16.mxu0 0
    %251 = vmatpush1.bf16.msra.mxu0 0
    %252 = vmatprep.subr.bf16.mxu0 0
    %253 = vmatpush1.bf16.msra.mxu0 0
    %254 = vmatprep.subr.bf16.mxu0 0
    %255 = vmatpush1.bf16.msra.mxu0 0
    %256 = vmatprep.subr.bf16.mxu0 0
    %257 = vmatpush1.bf16.msra.mxu0 0
    %258 = vmatprep.subr.bf16.mxu0 0
    %259 = vmatpush1.bf16.msra.mxu0 0
    %260 = vmatprep.subr.bf16.mxu0 0
    %261 = vmatpush1.bf16.msra.mxu0 0
    %262 = vmatprep.mubr.bf16.mxu0 0
    %263 = vmatmul.mubr.bf16.gmra.mrb[0].mxu0 %v161
    %v264 = vpop.f32.mrb[0].mxu0
    %v265 = vadd.f32 %v181, %v264
    %v266 = vpop.f32.mrb[0].mxu0
    %v267 = vpop.f32.mrb[0].mxu0
    %v268 = vpop.f32.mrb[0].mxu0
    %269 = vdwg.mxu0
    %270 = vadd.xlane.f32.xlu0 %v265
    %v271 = vpop.xlane.xlu0 %270
    %v272 = vmul.f32 %v271, 0.03125
    %v273 = vmul.f32 %v265, %v265
    %274 = vadd.xlane.f32.xlu0 %v273
    %v275 = vpop.xlane.xlu0 %274
    %v276 = vmul.f32 %v275, 0.03125
    %v277 = vmul.f32 %v272, %v272
    %v278 = vsub.f32 %v276, %v277
    %v279 = vmax.f32 %v278, 0.0
    %v280 = vsub.f32 %v265, %v272
    %v281 = vadd.f32 %v279, 1e-05
    %v282 = vrsqrt.pop %v281
    %v283 = vmul.f32 %v280, %v282
    %v284 = vmul.f32 %v283, %v153
    %v285 = vadd.f32 %v284, %v158
    %v286 = vmax.f32 %v285, 0.0
    %v287 = vpack.c.bf16 %v286, %v286
    %v288 = vld [vmem:[#allocation8] sm:$0xf]
    %v289 = vld [vmem:[#allocation8 + $0x4] sm:$0xf]
    %v290 = vld [vmem:[#allocation8 + $0x8] sm:$0xf]
    %v291 = vld [vmem:[#allocation8 + $0xc] sm:$0xf]
    %v292 = vld [vmem:[#allocation8 + $0x10] sm:$0xf]
    %v293 = vld [vmem:[#allocation8 + $0x14] sm:$0xf]
    %v294 = vld [vmem:[#allocation8 + $0x18] sm:$0xf]
    %v295 = vld [vmem:[#allocation8 + $0x1c] sm:$0xf]
    %v296 = vld [vmem:[#allocation8 + $0x20] sm:$0xf]
    %v297 = vld [vmem:[#allocation8 + $0x24] sm:$0xf]
    %v298 = vld [vmem:[#allocation8 + $0x28] sm:$0xf]
    %v299 = vld [vmem:[#allocation8 + $0x2c] sm:$0xf]
    %v300 = vld [vmem:[#allocation8 + $0x30] sm:$0xf]
    %v301 = vld [vmem:[#allocation8 + $0x34] sm:$0xf]
    %v302 = vld [vmem:[#allocation8 + $0x38] sm:$0xf]
    %v303 = vld [vmem:[#allocation8 + $0x3c] sm:$0xf]
    %v304 = vld [vmem:[%s5] sm:$0x1]
    %v306 = vlaneseq
    %v307 = vshrl.u32 %v306, 7
    %v308 = vsub.s32 0, %v307
    %v309 = vrot.slane %v304, %v308
    %v327 = vunpack.c.l.b16 %v288
    %v328 = vunpack.c.l.b16 %v289
    %v329 = vunpack.c.l.b16 %v290
    %v330 = vunpack.c.l.b16 %v291
    %v331 = vunpack.c.l.b16 %v292
    %v332 = vunpack.c.l.b16 %v293
    %v333 = vunpack.c.l.b16 %v294
    %v334 = vunpack.c.l.b16 %v295
    %v335 = vunpack.c.l.b16 %v296
    %v336 = vunpack.c.l.b16 %v297
    %v337 = vunpack.c.l.b16 %v298
    %v338 = vunpack.c.l.b16 %v299
    %v339 = vunpack.c.l.b16 %v300
    %v340 = vunpack.c.l.b16 %v301
    %v341 = vunpack.c.l.b16 %v302
    %v342 = vunpack.c.l.b16 %v303
    %v343 = vpack.c.b16 %v328, %v327
    %v344 = vpack.c.b16 %v330, %v329
    %v345 = vpack.c.b16 %v332, %v331
    %v346 = vpack.c.b16 %v334, %v333
    %v347 = vpack.c.b16 %v336, %v335
    %v348 = vpack.c.b16 %v338, %v337
    %v349 = vpack.c.b16 %v340, %v339
    %v350 = vpack.c.b16 %v342, %v341
    %359 = vmatprep.subr.bf16.mxu0 0
    %360 = vmatpush1.bf16.msra.mxu0 %v343
    %361 = vmatprep.subr.bf16.mxu0 0
    %362 = vmatpush1.bf16.msra.mxu0 %v344
    %363 = vmatprep.subr.bf16.mxu0 0
    %364 = vmatpush1.bf16.msra.mxu0 %v345
    %365 = vmatprep.subr.bf16.mxu0 0
    %366 = vmatpush1.bf16.msra.mxu0 %v346
    %367 = vmatprep.subr.bf16.mxu0 0
    %368 = vmatpush1.bf16.msra.mxu0 %v347
    %369 = vmatprep.subr.bf16.mxu0 0
    %370 = vmatpush1.bf16.msra.mxu0 %v348
    %371 = vmatprep.subr.bf16.mxu0 0
    %372 = vmatpush1.bf16.msra.mxu0 %v349
    %373 = vmatprep.subr.bf16.mxu0 0
    %374 = vmatpush1.bf16.msra.mxu0 %v350
    %375 = vmatprep.subr.bf16.mxu0 0
    %376 = vmatpush1.bf16.msra.mxu0 0
    %377 = vmatprep.subr.bf16.mxu0 0
    %378 = vmatpush1.bf16.msra.mxu0 0
    %379 = vmatprep.subr.bf16.mxu0 0
    %380 = vmatpush1.bf16.msra.mxu0 0
    %381 = vmatprep.subr.bf16.mxu0 0
    %382 = vmatpush1.bf16.msra.mxu0 0
    %383 = vmatprep.subr.bf16.mxu0 0
    %384 = vmatpush1.bf16.msra.mxu0 0
    %385 = vmatprep.subr.bf16.mxu0 0
    %386 = vmatpush1.bf16.msra.mxu0 0
    %387 = vmatprep.subr.bf16.mxu0 0
    %388 = vmatpush1.bf16.msra.mxu0 0
    %389 = vmatprep.subr.bf16.mxu0 0
    %390 = vmatpush1.bf16.msra.mxu0 0
    %391 = vmatprep.mubr.bf16.mxu0 0
    %392 = vmatmul.mubr.bf16.gmra.mrb[0].mxu0 %v287
    %v393 = vpop.f32.mrb[0].mxu0
    %v394 = vadd.f32 %v309, %v393
    %v395 = vpop.f32.mrb[0].mxu0
    %v396 = vpop.f32.mrb[0].mxu0
    %v397 = vpop.f32.mrb[0].mxu0
    %398 = vdwg.mxu0
    %399 = vst [vmem:[#allocation10] sm:$0xff] %v394
    // Predicated region
    $region42: #{tpu_custom_call.1} parent=1 // pred_check
      _
    $region43: #{tpu_custom_call.1} parent=1 // pred_check_branch
      %401 = sbr.rel (0) target = $region45
    $region44: #{tpu_custom_call.1} parent=1 // pred_region
      %s403 = ssub.s32 128, 128
      %404 = vsyncadd [#allocation4], %s403
      %s406 = sshll.u32 [#allocation10], 4
      %s407 = int_to_ptr.vmem [resolvable:$true] %s406
      %409 = dma.vmem_to_hbm [thread:$0]  %s407, 128, %s6, [#allocation4]
    $region45: #{tpu_custom_call.1} parent=1 // pred_fallthru
      _
    // Predicated region
    $region46: #{tpu_custom_call.1} parent=1 // pred_check
      _
    $region47: #{tpu_custom_call.1} parent=1 // pred_check_branch
      %411 = sbr.rel (0) target = $region49
    $region48: #{tpu_custom_call.1} parent=1 // pred_region
      %412 = dma.done [#allocation4], 128
    $region49: #{tpu_custom_call.1} parent=1 // pred_fallthru
      _
    %413 = vsyncpa [#allocation3], 1
    %414 = vsyncpa [#allocation6], 1
    %415 = vsyncpa [#allocation9], 1
    %416 = vsyncpa [#allocation4], 1

// kernel: tpu_custom_call.1
$region0: #{tpu_custom_call.1}
  #allocation0 [shape = 'u32[]', space=smem, size = 0x4, offset = 0x4, fixed_abs, tag = 'smem constant byte address 0x4 - core index']
  #allocation1 [shape = 'u32[144,128]{1,0:T(1,128)}', space=vmem, size = 0x12000, scoped, tag = 'internal scratch']
  %s0 = inlined_call_operand.hbm [shape: bf16[8,16], index: 0, kind: input, shape index: {}]
  %s1 = inlined_call_operand.hbm [shape: bf16[16,128], index: 1, kind: input, shape index: {}]
  %s2 = inlined_call_operand.hbm [shape: bf16[128,128], index: 2, kind: input, shape index: {}]
  %s3 = inlined_call_operand.hbm [shape: bf16[128,128], index: 3, kind: input, shape index: {}]
  %s4 = inlined_call_operand.vmem [shape: f32[8,128], index: 4, kind: input, shape index: {}]
  %s5 = inlined_call_operand.vmem [shape: f32[1,128], index: 5, kind: input, shape index: {}]
  %s6 = inlined_call_operand.hbm [shape: f32[8,128], index: 6, kind: output, shape index: {}]
  %s7 = sld [smem:[#allocation0]]
  $region50: #{tpu_custom_call.1} parent=0
    _
  %s9 = ssub.s32 1, %s7
  %s10 = scalar_select 0, %s9, %s7
  $region1: #{tpu_custom_call.1} parent=0
    #allocation2 [shape = 'u8[2048]{0}', space=vmem, size = 0x800, scoped, tag = 'input window, operand 0, single buffered']
    #allocation3 [shape = 's32[1]{0}', space=sflag, size = 0x4, scoped, tag = 'scoped memory for tpu_custom_call.1']
    #allocation4 [shape = 's32[1]{0}', space=sflag, size = 0x4, scoped, tag = 'scoped memory for tpu_custom_call.1']
    #allocation5 [shape = 'u8[4096]{0}', space=vmem, size = 0x1000, scoped, tag = 'input window, operand 1, single buffered']
    #allocation6 [shape = 's32[1]{0}', space=sflag, size = 0x4, scoped, tag = 'scoped memory for tpu_custom_call.1']
    #allocation7 [shape = 'u8[32768]{0}', space=vmem, size = 0x8000, scoped, tag = 'input window, operand 2, single buffered']
    #allocation8 [shape = 'u8[32768]{0}', space=vmem, size = 0x8000, scoped, tag = 'input window, operand 3, single buffered']
    #allocation9 [shape = 's32[1]{0}', space=sflag, size = 0x4, scoped, tag = 'scoped memory for tpu_custom_call.1']
    #allocation10 [shape = 'u8[4096]{0}', space=vmem, size = 0x1000, scoped, tag = 'output window, operand 0, single buffered']
    %11 = vsyncpa [#allocation3], 0
    %12 = vsyncpa [#allocation6], 0
    %13 = vsyncpa [#allocation9], 0
    %14 = vsyncpa [#allocation4], 0
    // Predicated region
    $region2: #{tpu_custom_call.1} parent=1 // pred_check
      _
    $region3: #{tpu_custom_call.1} parent=1 // pred_check_branch
      %16 = sbr.rel (0) target = $region5
    $region4: #{tpu_custom_call.1} parent=1 // pred_region
      %s18 = ssub.s32 64, 64
      %19 = vsyncadd [#allocation3], %s18
      %s21 = sshll.u32 [#allocation2], 4
      %s22 = int_to_ptr.vmem [resolvable:$true] %s21
      %24 = dma.hbm_to_vmem [thread:$0]  %s0, 64, %s22, [#allocation3]
    $region5: #{tpu_custom_call.1} parent=1 // pred_fallthru
      _
    // Predicated region
    $region6: #{tpu_custom_call.1} parent=1 // pred_check
      _
    $region7: #{tpu_custom_call.1} parent=1 // pred_check_branch
      %26 = sbr.rel (0) target = $region9
    $region8: #{tpu_custom_call.1} parent=1 // pred_region
      %s28 = ssub.s32 128, 128
      %29 = vsyncadd [#allocation6], %s28
      %s30 = sshll.u32 [#allocation5], 4
      %s31 = int_to_ptr.vmem [resolvable:$true] %s30
      %36 = dma.hbm_to_vmem [thread:$0]  %s1, 128, %s31, [#allocation6], 64, 64, 4
    $region9: #{tpu_custom_call.1} parent=1 // pred_fallthru
      _
    // Predicated region
    $region10: #{tpu_custom_call.1} parent=1 // pred_check
      _
    $region11: #{tpu_custom_call.1} parent=1 // pred_check_branch
      %38 = sbr.rel (0) target = $region13
    $region12: #{tpu_custom_call.1} parent=1 // pred_region
      %s40 = ssub.s32 1024, 1024
      %41 = vsyncadd [#allocation6], %s40
      %s42 = sshll.u32 [#allocation7], 4
      %s43 = int_to_ptr.vmem [resolvable:$true] %s42
      %48 = dma.hbm_to_vmem [thread:$0]  %s2, 1024, %s43, [#allocation6], 64, 64, 4
    $region13: #{tpu_custom_call.1} parent=1 // pred_fallthru
      _
    // Predicated region
    $region14: #{tpu_custom_call.1} parent=1 // pred_check
      _
    $region15: #{tpu_custom_call.1} parent=1 // pred_check_branch
      %50 = sbr.rel (0) target = $region17
    $region16: #{tpu_custom_call.1} parent=1 // pred_region
      %s52 = ssub.s32 1024, 1024
      %53 = vsyncadd [#allocation9], %s52
      %s54 = sshll.u32 [#allocation8], 4
      %s55 = int_to_ptr.vmem [resolvable:$true] %s54
      %60 = dma.hbm_to_vmem [thread:$0]  %s3, 1024, %s55, [#allocation9], 64, 64, 4
    $region17: #{tpu_custom_call.1} parent=1 // pred_fallthru
      _
    // Predicated region
    $region18: #{tpu_custom_call.1} parent=1 // pred_check
      _
    $region19: #{tpu_custom_call.1} parent=1 // pred_check_branch
      %62 = sbr.rel (0) target = $region21
    $region20: #{tpu_custom_call.1} parent=1 // pred_region
      _
    $region21: #{tpu_custom_call.1} parent=1 // pred_fallthru
      _
    // Predicated region
    $region22: #{tpu_custom_call.1} parent=1 // pred_check
      _
    $region23: #{tpu_custom_call.1} parent=1 // pred_check_branch
      %64 = sbr.rel (0) target = $region25
    $region24: #{tpu_custom_call.1} parent=1 // pred_region
      _
    $region25: #{tpu_custom_call.1} parent=1 // pred_fallthru
      _
    // Predicated region
    $region26: #{tpu_custom_call.1} parent=1 // pred_check
      _
    $region27: #{tpu_custom_call.1} parent=1 // pred_check_branch
      %66 = sbr.rel (0) target = $region29
    $region28: #{tpu_custom_call.1} parent=1 // pred_region
      %67 = dma.done [#allocation3], 64
    $region29: #{tpu_custom_call.1} parent=1 // pred_fallthru
      _
    // Predicated region
    $region30: #{tpu_custom_call.1} parent=1 // pred_check
      _
    $region31: #{tpu_custom_call.1} parent=1 // pred_check_branch
      %69 = sbr.rel (0) target = $region33
    $region32: #{tpu_custom_call.1} parent=1 // pred_region
      %70 = dma.done [#allocation6], 128
    $region33: #{tpu_custom_call.1} parent=1 // pred_fallthru
      _
    // Predicated region
    $region34: #{tpu_custom_call.1} parent=1 // pred_check
      _
    $region35: #{tpu_custom_call.1} parent=1 // pred_check_branch
      %72 = sbr.rel (0) target = $region37
    $region36: #{tpu_custom_call.1} parent=1 // pred_region
      %73 = dma.done [#allocation6], 1024
    $region37: #{tpu_custom_call.1} parent=1 // pred_fallthru
      _
    // Predicated region
    $region38: #{tpu_custom_call.1} parent=1 // pred_check
      _
    $region39: #{tpu_custom_call.1} parent=1 // pred_check_branch
      %75 = sbr.rel (0) target = $region41
    $region40: #{tpu_custom_call.1} parent=1 // pred_region
      %76 = dma.done [#allocation9], 1024
    $region41: #{tpu_custom_call.1} parent=1 // pred_fallthru
      _
    %v78 = vld [vmem:[#allocation2] sm:$0xf]
    %v79 = vld [vmem:[%s4] sm:$0xff]
    %v80 = vld [vmem:[#allocation5] sm:$0xf]
    %v81 = vld [vmem:[#allocation5 + $0x4] sm:$0xf]
    %v82 = vlaneseq
    %v83 = vshrl.u32 %v82, 7
    %v84 = vsub.s32 0, %v83
    %v85 = vrot.slane %v79, %v84
    %v88 = vunpack.c.l.b16 %v80
    %v89 = vunpack.c.l.b16 %v81
    %v90 = vpack.c.b16 %v89, %v88
    %vm92 = vcmask 130048
    %v94 = vsel %vm92, %v78, 0
    %96 = vmatprep.subr.bf16.mxu0 0
    %97 = vmatpush1.bf16.msra.mxu0 %v90
    %98 = vmatprep.subr.bf16.mxu0 0
    %99 = vmatpush1.bf16.msra.mxu0 0
    %100 = vmatprep.subr.bf16.mxu0 0
    %101 = vmatpush1.bf16.msra.mxu0 0
    %102 = vmatprep.subr.bf16.mxu0 0
    %103 = vmatpush1.bf16.msra.mxu0 0
    %104 = vmatprep.subr.bf16.mxu0 0
    %105 = vmatpush1.bf16.msra.mxu0 0
    %106 = vmatprep.subr.bf16.mxu0 0
    %107 = vmatpush1.bf16.msra.mxu0 0
    %108 = vmatprep.subr.bf16.mxu0 0
    %109 = vmatpush1.bf16.msra.mxu0 0
    %110 = vmatprep.subr.bf16.mxu0 0
    %111 = vmatpush1.bf16.msra.mxu0 0
    %112 = vmatprep.subr.bf16.mxu0 0
    %113 = vmatpush1.bf16.msra.mxu0 0
    %114 = vmatprep.subr.bf16.mxu0 0
    %115 = vmatpush1.bf16.msra.mxu0 0
    %116 = vmatprep.subr.bf16.mxu0 0
    %117 = vmatpush1.bf16.msra.mxu0 0
    %118 = vmatprep.subr.bf16.mxu0 0
    %119 = vmatpush1.bf16.msra.mxu0 0
    %120 = vmatprep.subr.bf16.mxu0 0
    %121 = vmatpush1.bf16.msra.mxu0 0
    %122 = vmatprep.subr.bf16.mxu0 0
    %123 = vmatpush1.bf16.msra.mxu0 0
    %124 = vmatprep.subr.bf16.mxu0 0
    %125 = vmatpush1.bf16.msra.mxu0 0
    %126 = vmatprep.subr.bf16.mxu0 0
    %127 = vmatpush1.bf16.msra.mxu0 0
    %128 = vmatprep.mubr.bf16.mxu0 0
    %129 = vmatmul.mubr.bf16.gmra.mrb[0].mxu0 %v94
    %v130 = vpop.f32.mrb[0].mxu0
    %v131 = vadd.f32 %v85, %v130
    %v132 = vpop.f32.mrb[0].mxu0
    %v133 = vpop.f32.mrb[0].mxu0
    %v134 = vpop.f32.mrb[0].mxu0
    %135 = vdwg.mxu0
    %136 = vadd.xlane.f32.xlu0 %v131
    %v137 = vpop.xlane.xlu0 %136
    %v138 = vmul.f32 %v137, 0.03125
    %v139 = vmul.f32 %v131, %v131
    %140 = vadd.xlane.f32.xlu0 %v139
    %v141 = vpop.xlane.xlu0 %140
    %v142 = vmul.f32 %v141, 0.03125
    %v143 = vmul.f32 %v138, %v138
    %v144 = vsub.f32 %v142, %v143
    %v145 = vmax.f32 %v144, 0.0
    %v146 = vsub.f32 %v131, %v138
    %v147 = vadd.f32 %v145, 1e-05
    %v148 = vrsqrt.pop %v147
    %v149 = vmul.f32 %v146, %v148
    %v150 = vlaneseq
    %v151 = vshrl.u32 %v150, 7
    %v152 = vsub.s32 2, %v151
    %v153 = vrot.slane %v79, %v152
    %v154 = vmul.f32 %v149, %v153
    %v155 = vlaneseq
    %v156 = vshrl.u32 %v155, 7
    %v157 = vsub.s32 3, %v156
    %v158 = vrot.slane %v79, %v157
    %v159 = vadd.f32 %v154, %v158
    %v160 = vmax.f32 %v159, 0.0
    %v161 = vpack.c.bf16 %v160, %v160
    %v162 = vld [vmem:[#allocation7] sm:$0xf]
    %v163 = vld [vmem:[#allocation7 + $0x4] sm:$0xf]
    %v164 = vld [vmem:[#allocation7 + $0x8] sm:$0xf]
    %v165 = vld [vmem:[#allocation7 + $0xc] sm:$0xf]
    %v166 = vld [vmem:[#allocation7 + $0x10] sm:$0xf]
    %v167 = vld [vmem:[#allocation7 + $0x14] sm:$0xf]
    %v168 = vld [vmem:[#allocation7 + $0x18] sm:$0xf]
    %v169 = vld [vmem:[#allocation7 + $0x1c] sm:$0xf]
    %v170 = vld [vmem:[#allocation7 + $0x20] sm:$0xf]
    %v171 = vld [vmem:[#allocation7 + $0x24] sm:$0xf]
    %v172 = vld [vmem:[#allocation7 + $0x28] sm:$0xf]
    %v173 = vld [vmem:[#allocation7 + $0x2c] sm:$0xf]
    %v174 = vld [vmem:[#allocation7 + $0x30] sm:$0xf]
    %v175 = vld [vmem:[#allocation7 + $0x34] sm:$0xf]
    %v176 = vld [vmem:[#allocation7 + $0x38] sm:$0xf]
    %v177 = vld [vmem:[#allocation7 + $0x3c] sm:$0xf]
    %v178 = vlaneseq
    %v179 = vshrl.u32 %v178, 7
    %v180 = vsub.s32 1, %v179
    %v181 = vrot.slane %v79, %v180
    %v198 = vunpack.c.l.b16 %v162
    %v199 = vunpack.c.l.b16 %v163
    %v200 = vunpack.c.l.b16 %v164
    %v201 = vunpack.c.l.b16 %v165
    %v202 = vunpack.c.l.b16 %v166
    %v203 = vunpack.c.l.b16 %v167
    %v204 = vunpack.c.l.b16 %v168
    %v205 = vunpack.c.l.b16 %v169
    %v206 = vunpack.c.l.b16 %v170
    %v207 = vunpack.c.l.b16 %v171
    %v208 = vunpack.c.l.b16 %v172
    %v209 = vunpack.c.l.b16 %v173
    %v210 = vunpack.c.l.b16 %v174
    %v211 = vunpack.c.l.b16 %v175
    %v212 = vunpack.c.l.b16 %v176
    %v213 = vunpack.c.l.b16 %v177
    %v214 = vpack.c.b16 %v199, %v198
    %v215 = vpack.c.b16 %v201, %v200
    %v216 = vpack.c.b16 %v203, %v202
    %v217 = vpack.c.b16 %v205, %v204
    %v218 = vpack.c.b16 %v207, %v206
    %v219 = vpack.c.b16 %v209, %v208
    %v220 = vpack.c.b16 %v211, %v210
    %v221 = vpack.c.b16 %v213, %v212
    %230 = vmatprep.subr.bf16.mxu0 0
    %231 = vmatpush1.bf16.msra.mxu0 %v214
    %232 = vmatprep.subr.bf16.mxu0 0
    %233 = vmatpush1.bf16.msra.mxu0 %v215
    %234 = vmatprep.subr.bf16.mxu0 0
    %235 = vmatpush1.bf16.msra.mxu0 %v216
    %236 = vmatprep.subr.bf16.mxu0 0
    %237 = vmatpush1.bf16.msra.mxu0 %v217
    %238 = vmatprep.subr.bf16.mxu0 0
    %239 = vmatpush1.bf16.msra.mxu0 %v218
    %240 = vmatprep.subr.bf16.mxu0 0
    %241 = vmatpush1.bf16.msra.mxu0 %v219
    %242 = vmatprep.subr.bf16.mxu0 0
    %243 = vmatpush1.bf16.msra.mxu0 %v220
    %244 = vmatprep.subr.bf16.mxu0 0
    %245 = vmatpush1.bf16.msra.mxu0 %v221
    %246 = vmatprep.subr.bf16.mxu0 0
    %247 = vmatpush1.bf16.msra.mxu0 0
    %248 = vmatprep.subr.bf16.mxu0 0
    %249 = vmatpush1.bf16.msra.mxu0 0
    %250 = vmatprep.subr.bf16.mxu0 0
    %251 = vmatpush1.bf16.msra.mxu0 0
    %252 = vmatprep.subr.bf16.mxu0 0
    %253 = vmatpush1.bf16.msra.mxu0 0
    %254 = vmatprep.subr.bf16.mxu0 0
    %255 = vmatpush1.bf16.msra.mxu0 0
    %256 = vmatprep.subr.bf16.mxu0 0
    %257 = vmatpush1.bf16.msra.mxu0 0
    %258 = vmatprep.subr.bf16.mxu0 0
    %259 = vmatpush1.bf16.msra.mxu0 0
    %260 = vmatprep.subr.bf16.mxu0 0
    %261 = vmatpush1.bf16.msra.mxu0 0
    %262 = vmatprep.mubr.bf16.mxu0 0
    %263 = vmatmul.mubr.bf16.gmra.mrb[0].mxu0 %v161
    %v264 = vpop.f32.mrb[0].mxu0
    %v265 = vadd.f32 %v181, %v264
    %v266 = vpop.f32.mrb[0].mxu0
    %v267 = vpop.f32.mrb[0].mxu0
    %v268 = vpop.f32.mrb[0].mxu0
    %269 = vdwg.mxu0
    %270 = vadd.xlane.f32.xlu0 %v265
    %v271 = vpop.xlane.xlu0 %270
    %v272 = vmul.f32 %v271, 0.03125
    %v273 = vmul.f32 %v265, %v265
    %274 = vadd.xlane.f32.xlu0 %v273
    %v275 = vpop.xlane.xlu0 %274
    %v276 = vmul.f32 %v275, 0.03125
    %v277 = vmul.f32 %v272, %v272
    %v278 = vsub.f32 %v276, %v277
    %v279 = vmax.f32 %v278, 0.0
    %v280 = vsub.f32 %v265, %v272
    %v281 = vadd.f32 %v279, 1e-05
    %v282 = vrsqrt.pop %v281
    %v283 = vmul.f32 %v280, %v282
    %v284 = vmul.f32 %v283, %v153
    %v285 = vadd.f32 %v284, %v158
    %v286 = vmax.f32 %v285, 0.0
    %v287 = vpack.c.bf16 %v286, %v286
    %v288 = vld [vmem:[#allocation8] sm:$0xf]
    %v289 = vld [vmem:[#allocation8 + $0x4] sm:$0xf]
    %v290 = vld [vmem:[#allocation8 + $0x8] sm:$0xf]
    %v291 = vld [vmem:[#allocation8 + $0xc] sm:$0xf]
    %v292 = vld [vmem:[#allocation8 + $0x10] sm:$0xf]
    %v293 = vld [vmem:[#allocation8 + $0x14] sm:$0xf]
    %v294 = vld [vmem:[#allocation8 + $0x18] sm:$0xf]
    %v295 = vld [vmem:[#allocation8 + $0x1c] sm:$0xf]
    %v296 = vld [vmem:[#allocation8 + $0x20] sm:$0xf]
    %v297 = vld [vmem:[#allocation8 + $0x24] sm:$0xf]
    %v298 = vld [vmem:[#allocation8 + $0x28] sm:$0xf]
    %v299 = vld [vmem:[#allocation8 + $0x2c] sm:$0xf]
    %v300 = vld [vmem:[#allocation8 + $0x30] sm:$0xf]
    %v301 = vld [vmem:[#allocation8 + $0x34] sm:$0xf]
    %v302 = vld [vmem:[#allocation8 + $0x38] sm:$0xf]
    %v303 = vld [vmem:[#allocation8 + $0x3c] sm:$0xf]
    %v304 = vld [vmem:[%s5] sm:$0x1]
    %v306 = vlaneseq
    %v307 = vshrl.u32 %v306, 7
    %v308 = vsub.s32 0, %v307
    %v309 = vrot.slane %v304, %v308
    %v327 = vunpack.c.l.b16 %v288
    %v328 = vunpack.c.l.b16 %v289
    %v329 = vunpack.c.l.b16 %v290
    %v330 = vunpack.c.l.b16 %v291
    %v331 = vunpack.c.l.b16 %v292
    %v332 = vunpack.c.l.b16 %v293
    %v333 = vunpack.c.l.b16 %v294
    %v334 = vunpack.c.l.b16 %v295
    %v335 = vunpack.c.l.b16 %v296
    %v336 = vunpack.c.l.b16 %v297
    %v337 = vunpack.c.l.b16 %v298
    %v338 = vunpack.c.l.b16 %v299
    %v339 = vunpack.c.l.b16 %v300
    %v340 = vunpack.c.l.b16 %v301
    %v341 = vunpack.c.l.b16 %v302
    %v342 = vunpack.c.l.b16 %v303
    %v343 = vpack.c.b16 %v328, %v327
    %v344 = vpack.c.b16 %v330, %v329
    %v345 = vpack.c.b16 %v332, %v331
    %v346 = vpack.c.b16 %v334, %v333
    %v347 = vpack.c.b16 %v336, %v335
    %v348 = vpack.c.b16 %v338, %v337
    %v349 = vpack.c.b16 %v340, %v339
    %v350 = vpack.c.b16 %v342, %v341
    %359 = vmatprep.subr.bf16.mxu0 0
    %360 = vmatpush1.bf16.msra.mxu0 %v343
    %361 = vmatprep.subr.bf16.mxu0 0
    %362 = vmatpush1.bf16.msra.mxu0 %v344
    %363 = vmatprep.subr.bf16.mxu0 0
    %364 = vmatpush1.bf16.msra.mxu0 %v345
    %365 = vmatprep.subr.bf16.mxu0 0
    %366 = vmatpush1.bf16.msra.mxu0 %v346
    %367 = vmatprep.subr.bf16.mxu0 0
    %368 = vmatpush1.bf16.msra.mxu0 %v347
    %369 = vmatprep.subr.bf16.mxu0 0
    %370 = vmatpush1.bf16.msra.mxu0 %v348
    %371 = vmatprep.subr.bf16.mxu0 0
    %372 = vmatpush1.bf16.msra.mxu0 %v349
    %373 = vmatprep.subr.bf16.mxu0 0
    %374 = vmatpush1.bf16.msra.mxu0 %v350
    %375 = vmatprep.subr.bf16.mxu0 0
    %376 = vmatpush1.bf16.msra.mxu0 0
    %377 = vmatprep.subr.bf16.mxu0 0
    %378 = vmatpush1.bf16.msra.mxu0 0
    %379 = vmatprep.subr.bf16.mxu0 0
    %380 = vmatpush1.bf16.msra.mxu0 0
    %381 = vmatprep.subr.bf16.mxu0 0
    %382 = vmatpush1.bf16.msra.mxu0 0
    %383 = vmatprep.subr.bf16.mxu0 0
    %384 = vmatpush1.bf16.msra.mxu0 0
    %385 = vmatprep.subr.bf16.mxu0 0
    %386 = vmatpush1.bf16.msra.mxu0 0
    %387 = vmatprep.subr.bf16.mxu0 0
    %388 = vmatpush1.bf16.msra.mxu0 0
    %389 = vmatprep.subr.bf16.mxu0 0
    %390 = vmatpush1.bf16.msra.mxu0 0
    %391 = vmatprep.mubr.bf16.mxu0 0
    %392 = vmatmul.mubr.bf16.gmra.mrb[0].mxu0 %v287
    %v393 = vpop.f32.mrb[0].mxu0
    %v394 = vadd.f32 %v309, %v393
    %v395 = vpop.f32.mrb[0].mxu0
    %v396 = vpop.f32.mrb[0].mxu0
    %v397 = vpop.f32.mrb[0].mxu0
    %398 = vdwg.mxu0
    %399 = vst [vmem:[#allocation10] sm:$0xff] %v394
    // Predicated region
    $region42: #{tpu_custom_call.1} parent=1 // pred_check
      _
    $region43: #{tpu_custom_call.1} parent=1 // pred_check_branch
      %401 = sbr.rel (0) target = $region45
    $region44: #{tpu_custom_call.1} parent=1 // pred_region
      %s403 = ssub.s32 128, 128
      %404 = vsyncadd [#allocation4], %s403
      %s406 = sshll.u32 [#allocation10], 4
      %s407 = int_to_ptr.vmem [resolvable:$true] %s406
      %409 = dma.vmem_to_hbm [thread:$0]  %s407, 128, %s6, [#allocation4]
    $region45: #{tpu_custom_call.1} parent=1 // pred_fallthru
      _
    // Predicated region
    $region46: #{tpu_custom_call.1} parent=1 // pred_check
      _
    $region47: #{tpu_custom_call.1} parent=1 // pred_check_branch
      %411 = sbr.rel (0) target = $region49
    $region48: #{tpu_custom_call.1} parent=1 // pred_region
      %412 = dma.done [#allocation4], 128
    $region49: #{tpu_custom_call.1} parent=1 // pred_fallthru
      _
    %413 = vsyncpa [#allocation3], 1
    %414 = vsyncpa [#allocation6], 1
    %415 = vsyncpa [#allocation9], 1
    %416 = vsyncpa [#allocation4], 1

</llo_original>
